<compile_context>
chip_gen: v7x
topology: tpu7x:2x2x1
jax: 0.10.0
libtpu: 0.0.40
codegen_flags: <defaults>
</compile_context>

<pallas_src>
import functools

import jax
import jax.numpy as jnp
from jax import lax
from jax.experimental import pallas as pl
from jax.experimental.pallas import tpu as pltpu

EPS = 1e-6


def _round_up(x, m):
    return ((x + m - 1) // m) * m


def _leaky_relu(x, neg_slope):
    return jnp.where(x >= 0, x, neg_slope * x)


def _pred_su(tau, u0, s0, alpha, beta, gamma):
    """Analytical RNA-velocity ODE solution (velovae pred_su), ReLU-clamped.

    Used only for the tiny (Ntype,G) initial-condition glue and the plain-JAX reference.
    """
    expb = jnp.exp(-beta * tau)
    expg = jnp.exp(-gamma * tau)
    unstab = (jnp.abs(gamma - beta) < EPS).astype(jnp.float32)
    upred = u0 * expb + alpha / beta * (1.0 - expb)
    s_stable = (s0 * expg
                + alpha / gamma * (1.0 - expg)
                + (alpha - beta * u0) / (gamma - beta + EPS) * (expg - expb))
    s_unstab = (s0 * expg
                + alpha / gamma * (1.0 - expg)
                + (beta * u0 - alpha) * tau * expg)
    spred = s_stable * (1.0 - unstab) + s_unstab * unstab
    return jnp.maximum(upred, 0.0), jnp.maximum(spred, 0.0)


def _ode_br_kernel(tau_ref, y_ref, tab_ref, uhat_ref, shat_ref, *, n_type):
    """Per-(row-tile, gene-block) branching-ODE evaluation.

    tau_ref: (tm, 1)            f32, leaky_relu(t - t_trans[y]) (precomputed in wrapper)
    y_ref:   (tm, 1)            i32 cell-type labels
    tab_ref: (8, n_type, gb)    stacked per-(type,gene) tables (see wrapper)
    """
    tau = tau_ref[...]                                   # (tm, 1)
    y = y_ref[...]                                       # (tm, 1)
    tm = tau.shape[0]
    gb = tab_ref.shape[-1]

    # one-hot(y): (tm, n_type) — exact row selector (one nonzero per row)
    type_ids = lax.broadcasted_iota(jnp.int32, (tm, n_type), 1)
    onehot = (type_ids == y).astype(jnp.float32)

    def gather(k):  # row-gather of table k via one small MXU matmul -> (tm, gb)
        return jnp.dot(onehot, tab_ref[k], preferred_element_type=jnp.float32)

    # broadcast tau once and reuse (JAX does not CSE broadcast_in_dim)
    tau_b = jnp.broadcast_to(tau, (tm, gb))

    expb = jnp.exp(gather(0) * tau_b)                    # exp(-beta  * tau)
    expg = jnp.exp(gather(1) * tau_b)                    # exp(-gamma * tau)

    # u already carries the per-gene scaling (folded into tables; scaling > 0 so ReLU commutes)
    upred = gather(2) + gather(3) * expb
    spred = gather(4) + gather(5) * expg + gather(6) * expb + gather(7) * (tau_b * expg)

    uhat_ref[...] = jnp.maximum(upred, 0.0).astype(uhat_ref.dtype)
    shat_ref[...] = jnp.maximum(spred, 0.0).astype(shat_ref.dtype)


def decoder_forward(t, y, par, log_params, neg_slope=0.0, tile_m=256,
                    gene_block=1024, out_dtype=jnp.bfloat16):
    """Pallas equivalent of decoder.forward(t, y, neg_slope)."""
    # exp of stored log-parameters (matches torch.exp(self.alpha) etc.)
    alpha = jnp.exp(log_params["alpha"]).astype(jnp.float32)      # (Ntype, G)
    beta = jnp.exp(log_params["beta"]).astype(jnp.float32)        # (Ntype, G)
    gamma = jnp.exp(log_params["gamma"]).astype(jnp.float32)      # (Ntype, G)
    u0 = jnp.exp(log_params["u0"]).astype(jnp.float32)            # (Ntype, G)
    s0 = jnp.exp(log_params["s0"]).astype(jnp.float32)            # (Ntype, G)
    t_trans = jnp.exp(log_params["t_trans"]).astype(jnp.float32)  # (Ntype,)
    scaling = jnp.exp(log_params["scaling"]).astype(jnp.float32)  # (G,)
    # sigma_u / sigma_s are exponentiated in the reference but unused by ode_br.
    _ = jnp.exp(log_params["sigma_u"]), jnp.exp(log_params["sigma_s"])

    n_type, G = alpha.shape
    N = t.shape[0]

    # ---- pad genes to a lane multiple (128) with values that keep all math finite ----
    Gp = _round_up(G, 128)
    gpad = Gp - G
    if gpad:
        pad2 = ((0, 0), (0, gpad))
        alpha = jnp.pad(alpha, pad2)
        beta = jnp.pad(beta, pad2, constant_values=1.0)
        gamma = jnp.pad(gamma, pad2, constant_values=2.0)
        u0 = jnp.pad(u0, pad2)
        s0 = jnp.pad(s0, pad2)
        scaling = jnp.pad(scaling, (0, gpad), constant_values=1.0)

    # ---- parameter-only glue (tiny, (Ntype,Gp)): per-type initial conditions ----
    tau0 = _leaky_relu(t_trans - t_trans[par], neg_slope)[:, None]              # (Ntype, 1)
    u0_hat, s0_hat = _pred_su(tau0, u0[par], s0[par], alpha[par], beta[par], gamma[par])

    # ---- hoist divisions / branch coefficients / scaling out of the (N,G) path ----
    aob = alpha / beta
    aog = alpha / gamma
    unstab = (jnp.abs(gamma - beta) < EPS).astype(jnp.float32)
    cs = (1.0 - unstab) * (alpha - beta * u0_hat) / (gamma - beta + EPS)
    cu = unstab * (beta * u0_hat - alpha)
    # kernel math:  expb = exp(T0*tau); expg = exp(T1*tau)
    #               u = T2 + T3*expb
    #               s = T4 + T5*expg + T6*expb + T7*(tau*expg)
    table = jnp.stack([
        -beta,                              # T0
        -gamma,                             # T1
        aob * scaling,                      # T2  (scaling folded in)
        (u0_hat - aob) * scaling,           # T3
        aog,                                # T4
        (s0_hat - aog) + cs,                # T5  expg coefficient
        -cs,                                # T6  expb coefficient
        cu,                                 # T7  tau*expg coefficient
    ], axis=0)                              # (8, Ntype, Gp)

    # ---- per-cell tau precomputed in the wrapper (tiny length-N gather) ----
    tau = _leaky_relu(t.reshape(-1, 1).astype(jnp.float32)
                      - t_trans[y.reshape(-1)][:, None], neg_slope)             # (N, 1)

    # ---- generation-aware tile sizing (accounts for gather/elementwise temporaries) ----
    try:
        vmem_cap = int(getattr(pltpu.get_tpu_info(), "vmem_capacity_bytes", 64 << 20))
    except Exception:  # pragma: no cover - conservative fallback
        vmem_cap = 64 << 20
    budget = min(max(vmem_cap // 2, 32 << 20), 64 << 20)      # 32 MiB on v7x, 64 MiB on v5e/v6e
    itemsize = jnp.dtype(out_dtype).itemsize
    row_align = {4: 8, 2: 16, 1: 32}.get(itemsize, 8)

    def est(tm_, gb_):
        live = 12 * tm_ * gb_ * 4                  # gather results + exp/mul temporaries
        outs = 2 * 2 * tm_ * gb_ * itemsize        # two outputs, double-buffered
        tab = 2 * 8 * n_type * gb_ * 4             # table block, double-buffered
        cols = 2 * 2 * tm_ * 4 * 2                 # tau / y columns, double-buffered
        return live + outs + tab + cols

    gb = max(128, min(Gp, _round_up(int(gene_block), 128)))
    while Gp % gb:
        gb -= 128
    tile = max(row_align,
               min((int(tile_m) // row_align) * row_align, _round_up(N, row_align)))
    while est(tile, gb) > budget:
        if tile > 4 * row_align:
            tile = max(row_align, (tile // 2 // row_align) * row_align)
        elif gb > 128:
            gb = max(128, (gb // 2 // 128) * 128)
            while Gp % gb:
                gb -= 128
        elif tile > row_align:
            tile = max(row_align, (tile // 2 // row_align) * row_align)
        else:
            break
    # prefer a tile that divides N exactly (no row padding -> no post-call slice copy)
    if N % row_align == 0:
        for cand in range(tile, row_align - 1, -row_align):
            if N % cand == 0:
                tile = cand
                break
    Np = _round_up(N, tile)

    tau2 = jnp.pad(tau, ((0, Np - N), (0, 0)))
    y2 = jnp.pad(y.reshape(-1, 1).astype(jnp.int32), ((0, Np - N), (0, 0)))

    vmem_limit = int(min(max(est(tile, gb) * 2, 32 << 20), (vmem_cap * 3) // 4))

    kernel = functools.partial(_ode_br_kernel, n_type=n_type)
    # TODO(synk): on v7x benchmark pltpu.CORE_PARALLEL on the row axis (2 TCs/chip).
    uhat, shat = pl.pallas_call(
        kernel,
        out_shape=(jax.ShapeDtypeStruct((Np, Gp), out_dtype),
                   jax.ShapeDtypeStruct((Np, Gp), out_dtype)),
        grid=(Np // tile, Gp // gb),
        in_specs=[
            pl.BlockSpec((tile, 1), lambda i, j: (i, 0)),            # tau
            pl.BlockSpec((tile, 1), lambda i, j: (i, 0)),            # y
            pl.BlockSpec((8, n_type, gb), lambda i, j: (0, 0, j)),   # stacked tables
        ],
        out_specs=(pl.BlockSpec((tile, gb), lambda i, j: (i, j)),
                   pl.BlockSpec((tile, gb), lambda i, j: (i, j))),
        compiler_params=pltpu.CompilerParams(
            dimension_semantics=("parallel", "parallel"),
            vmem_limit_bytes=vmem_limit),
    )(tau2, y2, table)

    if Np != N or Gp != G:   # only pay the un-padding copy when padding actually happened
        uhat = uhat[:N, :G]
        shat = shat[:N, :G]
    return uhat, shat


def _reference_forward(t, y, par, log_params, neg_slope=0.0):
    """Plain-JAX mirror of ode_br for correctness checking."""
    alpha = jnp.exp(log_params["alpha"])
    beta = jnp.exp(log_params["beta"])
    gamma = jnp.exp(log_params["gamma"])
    u0 = jnp.exp(log_params["u0"])
    s0 = jnp.exp(log_params["s0"])
    t_trans = jnp.exp(log_params["t_trans"])
    scaling = jnp.exp(log_params["scaling"])
    tau0 = _leaky_relu(t_trans - t_trans[par], neg_slope)[:, None]
    u0_hat, s0_hat = _pred_su(tau0, u0[par], s0[par], alpha[par], beta[par], gamma[par])
    tau = _leaky_relu(t.reshape(-1, 1) - t_trans[y][:, None], neg_slope)
    uhat, shat = _pred_su(tau, u0_hat[y], s0_hat[y], alpha[y], beta[y], gamma[y])
    return uhat * scaling[None, :], shat


def _run_case(key, N, G, NTYPE, par_list, t_trans_vals, tile_m, gene_block,
              out_dtype, rtol, atol):
    ks = jax.random.split(key, 12)
    log_params = {
        "alpha":   0.3 * jax.random.normal(ks[0], (NTYPE, G), jnp.float32),
        "beta":    0.3 * jax.random.normal(ks[1], (NTYPE, G), jnp.float32),
        "gamma":   0.3 * jax.random.normal(ks[2], (NTYPE, G), jnp.float32) + 0.5,
        "u0":      0.3 * jax.random.normal(ks[3], (NTYPE, G), jnp.float32) - 1.0,
        "s0":      0.3 * jax.random.normal(ks[4], (NTYPE, G), jnp.float32) - 1.0,
        "t_trans": jnp.log(jnp.asarray(t_trans_vals, jnp.float32) + 1e-10),
        "scaling": 0.1 * jax.random.normal(ks[5], (G,), jnp.float32),
        "sigma_u": 0.1 * jax.random.normal(ks[6], (G,), jnp.float32),   # unused by ode_br
        "sigma_s": 0.1 * jax.random.normal(ks[7], (G,), jnp.float32),   # unused by ode_br
    }
    par = jnp.asarray(par_list, jnp.int32)                       # parent type per type
    t_in = jax.random.uniform(ks[8], (N, 1), jnp.float32)        # cell times
    y_in = jax.random.randint(ks[9], (N,), 0, NTYPE, jnp.int32)  # cell type labels

    uhat, shat = decoder_forward(t_in, y_in, par, log_params, neg_slope=0.0,
                                 tile_m=tile_m, gene_block=gene_block,
                                 out_dtype=out_dtype)
    uhat, shat = jax.block_until_ready((uhat, shat))

    u_ref, s_ref = _reference_forward(t_in, y_in, par, log_params, neg_slope=0.0)
    assert uhat.shape == (N, G) and shat.shape == (N, G)
    assert uhat.dtype == out_dtype and shat.dtype == out_dtype
    assert jnp.allclose(uhat.astype(jnp.float32), u_ref, rtol=rtol, atol=atol)
    assert jnp.allclose(shat.astype(jnp.float32), s_ref, rtol=rtol, atol=atol)


if __name__ == "__main__":
    key = jax.random.PRNGKey(0)
    k1, k2, k3 = jax.random.split(key, 3)

    # small canonical case, f32 outputs (tight tolerance)
    _run_case(k1, N=16, G=128, NTYPE=4, par_list=[0, 0, 1, 1],
              t_trans_vals=[1e-10, 0.15, 0.35, 0.55],
              tile_m=256, gene_block=1024, out_dtype=jnp.float32,
              rtol=3e-4, atol=1e-5)

    # ragged case, f32: exercises N-padding (300 -> 384), gene-padding (200 -> 256)
    _run_case(k2, N=300, G=200, NTYPE=5, par_list=[0, 0, 1, 1, 2],
              t_trans_vals=[0.01, 0.1, 0.25, 0.4, 0.6],
              tile_m=128, gene_block=1024, out_dtype=jnp.float32,
              rtol=3e-4, atol=1e-5)

    # default bf16 outputs + multi-block gene grid: exercises grid=(4,3)
    _run_case(k3, N=256, G=384, NTYPE=6, par_list=[0, 0, 1, 1, 2, 3],
              t_trans_vals=[0.01, 0.08, 0.2, 0.35, 0.5, 0.65],
              tile_m=64, gene_block=128, out_dtype=jnp.bfloat16,
              rtol=2e-2, atol=2e-2)

    print("KERNEL_OK")
</pallas_src>

<mosaic_0001>
module attributes {stable_mosaic.version = 11 : i64} {
  func.func @_ode_br_kernel(%arg0: i32, %arg1: i32, %arg2: memref<16x1xf32, #tpu.memory_space<vmem>>, %arg3: memref<16x1xi32, #tpu.memory_space<vmem>>, %arg4: memref<8x4x128xf32, #tpu.memory_space<vmem>>, %arg5: memref<16x128xf32, #tpu.memory_space<vmem>>, %arg6: memref<16x128xf32, #tpu.memory_space<vmem>>) attributes {dimension_semantics = [#tpu.dimension_semantics<parallel>, #tpu.dimension_semantics<parallel>], iteration_bounds = array<i64: 1, 1>, scalar_prefetch = 0 : i64, scratch_operands = 0 : i64, tpu.core_type = #tpu.core_type<tc>, window_params = [{transform_indices = @transform_0, window_bounds = array<i64: 16, 1>}, {transform_indices = @transform_1, window_bounds = array<i64: 16, 1>}, {transform_indices = @transform_2, window_bounds = array<i64: 8, 4, 128>}, {transform_indices = @transform_3, window_bounds = array<i64: 16, 128>}, {transform_indices = @transform_4, window_bounds = array<i64: 16, 128>}]} {
    %c0 = arith.constant 0 : index
    %c0_0 = arith.constant 0 : index
    %0 = vector.load %arg2[%c0, %c0_0] : memref<16x1xf32, #tpu.memory_space<vmem>>, vector<16x1xf32>
    %c0_1 = arith.constant 0 : index
    %c0_2 = arith.constant 0 : index
    %1 = vector.load %arg3[%c0_1, %c0_2] : memref<16x1xi32, #tpu.memory_space<vmem>>, vector<16x1xi32>
    %2 = tpu.iota {dimensions = array<i32: 1>} : vector<16x4xi32>
    %3 = vector.broadcast %1 : vector<16x1xi32> to vector<16x4xi32>
    %4 = arith.cmpi eq, %2, %3 : vector<16x4xi32>
    %5 = arith.extui %4 : vector<16x4xi1> to vector<16x4xi32>
    %6 = arith.sitofp %5 : vector<16x4xi32> to vector<16x4xf32>
    %7 = vector.shape_cast %0 : vector<16x1xf32> to vector<16x1xf32>
    %8 = vector.broadcast %7 : vector<16x1xf32> to vector<16x128xf32>
    %c0_3 = arith.constant 0 : index
    %c0_4 = arith.constant 0 : index
    %c0_5 = arith.constant 0 : index
    %9 = vector.load %arg4[%c0_3, %c0_4, %c0_5] : memref<8x4x128xf32, #tpu.memory_space<vmem>>, vector<1x4x128xf32>
    %10 = vector.shape_cast %9 : vector<1x4x128xf32> to vector<4x128xf32>
    %cst = arith.constant dense<0.000000e+00> : vector<16x128xf32>
    %11 = tpu.matmul %6, %10, %cst {dimension_numbers = #tpu.dot_dimension_numbers<[1], [0], [0], [1], [0, 0, 1, 1], [], []>} : vector<16x4xf32>, vector<4x128xf32>, vector<16x128xf32> -> vector<16x128xf32>
    %12 = arith.mulf %11, %8 : vector<16x128xf32>
    %13 = math.exp %12 : vector<16x128xf32>
    %c1 = arith.constant 1 : index
    %c0_6 = arith.constant 0 : index
    %c0_7 = arith.constant 0 : index
    %14 = vector.load %arg4[%c1, %c0_6, %c0_7] : memref<8x4x128xf32, #tpu.memory_space<vmem>>, vector<1x4x128xf32>
    %15 = vector.shape_cast %14 : vector<1x4x128xf32> to vector<4x128xf32>
    %cst_8 = arith.constant dense<0.000000e+00> : vector<16x128xf32>
    %16 = tpu.matmul %6, %15, %cst_8 {dimension_numbers = #tpu.dot_dimension_numbers<[1], [0], [0], [1], [0, 0, 1, 1], [], []>} : vector<16x4xf32>, vector<4x128xf32>, vector<16x128xf32> -> vector<16x128xf32>
    %17 = arith.mulf %16, %8 : vector<16x128xf32>
    %18 = math.exp %17 : vector<16x128xf32>
    %c2 = arith.constant 2 : index
    %c0_9 = arith.constant 0 : index
    %c0_10 = arith.constant 0 : index
    %19 = vector.load %arg4[%c2, %c0_9, %c0_10] : memref<8x4x128xf32, #tpu.memory_space<vmem>>, vector<1x4x128xf32>
    %20 = vector.shape_cast %19 : vector<1x4x128xf32> to vector<4x128xf32>
    %cst_11 = arith.constant dense<0.000000e+00> : vector<16x128xf32>
    %21 = tpu.matmul %6, %20, %cst_11 {dimension_numbers = #tpu.dot_dimension_numbers<[1], [0], [0], [1], [0, 0, 1, 1], [], []>} : vector<16x4xf32>, vector<4x128xf32>, vector<16x128xf32> -> vector<16x128xf32>
    %c3 = arith.constant 3 : index
    %c0_12 = arith.constant 0 : index
    %c0_13 = arith.constant 0 : index
    %22 = vector.load %arg4[%c3, %c0_12, %c0_13] : memref<8x4x128xf32, #tpu.memory_space<vmem>>, vector<1x4x128xf32>
    %23 = vector.shape_cast %22 : vector<1x4x128xf32> to vector<4x128xf32>
    %cst_14 = arith.constant dense<0.000000e+00> : vector<16x128xf32>
    %24 = tpu.matmul %6, %23, %cst_14 {dimension_numbers = #tpu.dot_dimension_numbers<[1], [0], [0], [1], [0, 0, 1, 1], [], []>} : vector<16x4xf32>, vector<4x128xf32>, vector<16x128xf32> -> vector<16x128xf32>
    %25 = arith.mulf %24, %13 : vector<16x128xf32>
    %26 = arith.addf %21, %25 : vector<16x128xf32>
    %c4 = arith.constant 4 : index
    %c0_15 = arith.constant 0 : index
    %c0_16 = arith.constant 0 : index
    %27 = vector.load %arg4[%c4, %c0_15, %c0_16] : memref<8x4x128xf32, #tpu.memory_space<vmem>>, vector<1x4x128xf32>
    %28 = vector.shape_cast %27 : vector<1x4x128xf32> to vector<4x128xf32>
    %cst_17 = arith.constant dense<0.000000e+00> : vector<16x128xf32>
    %29 = tpu.matmul %6, %28, %cst_17 {dimension_numbers = #tpu.dot_dimension_numbers<[1], [0], [0], [1], [0, 0, 1, 1], [], []>} : vector<16x4xf32>, vector<4x128xf32>, vector<16x128xf32> -> vector<16x128xf32>
    %c5 = arith.constant 5 : index
    %c0_18 = arith.constant 0 : index
    %c0_19 = arith.constant 0 : index
    %30 = vector.load %arg4[%c5, %c0_18, %c0_19] : memref<8x4x128xf32, #tpu.memory_space<vmem>>, vector<1x4x128xf32>
    %31 = vector.shape_cast %30 : vector<1x4x128xf32> to vector<4x128xf32>
    %cst_20 = arith.constant dense<0.000000e+00> : vector<16x128xf32>
    %32 = tpu.matmul %6, %31, %cst_20 {dimension_numbers = #tpu.dot_dimension_numbers<[1], [0], [0], [1], [0, 0, 1, 1], [], []>} : vector<16x4xf32>, vector<4x128xf32>, vector<16x128xf32> -> vector<16x128xf32>
    %33 = arith.mulf %32, %18 : vector<16x128xf32>
    %34 = arith.addf %29, %33 : vector<16x128xf32>
    %c6 = arith.constant 6 : index
    %c0_21 = arith.constant 0 : index
    %c0_22 = arith.constant 0 : index
    %35 = vector.load %arg4[%c6, %c0_21, %c0_22] : memref<8x4x128xf32, #tpu.memory_space<vmem>>, vector<1x4x128xf32>
    %36 = vector.shape_cast %35 : vector<1x4x128xf32> to vector<4x128xf32>
    %cst_23 = arith.constant dense<0.000000e+00> : vector<16x128xf32>
    %37 = tpu.matmul %6, %36, %cst_23 {dimension_numbers = #tpu.dot_dimension_numbers<[1], [0], [0], [1], [0, 0, 1, 1], [], []>} : vector<16x4xf32>, vector<4x128xf32>, vector<16x128xf32> -> vector<16x128xf32>
    %38 = arith.mulf %37, %13 : vector<16x128xf32>
    %39 = arith.addf %34, %38 : vector<16x128xf32>
    %c7 = arith.constant 7 : index
    %c0_24 = arith.constant 0 : index
    %c0_25 = arith.constant 0 : index
    %40 = vector.load %arg4[%c7, %c0_24, %c0_25] : memref<8x4x128xf32, #tpu.memory_space<vmem>>, vector<1x4x128xf32>
    %41 = vector.shape_cast %40 : vector<1x4x128xf32> to vector<4x128xf32>
    %cst_26 = arith.constant dense<0.000000e+00> : vector<16x128xf32>
    %42 = tpu.matmul %6, %41, %cst_26 {dimension_numbers = #tpu.dot_dimension_numbers<[1], [0], [0], [1], [0, 0, 1, 1], [], []>} : vector<16x4xf32>, vector<4x128xf32>, vector<16x128xf32> -> vector<16x128xf32>
    %43 = arith.mulf %8, %18 : vector<16x128xf32>
    %44 = arith.mulf %42, %43 : vector<16x128xf32>
    %45 = arith.addf %39, %44 : vector<16x128xf32>
    %cst_27 = arith.constant 0.000000e+00 : f32
    %46 = vector.broadcast %cst_27 : f32 to vector<16x128xf32>
    %47 = arith.maximumf %26, %46 : vector<16x128xf32>
    %c0_28 = arith.constant 0 : index
    %c0_29 = arith.constant 0 : index
    %48 = vector.load %arg5[%c0_28, %c0_29] : memref<16x128xf32, #tpu.memory_space<vmem>>, vector<16x128xf32>
    tpu.vector_store %arg5[%c0_28, %c0_29], %47 {strides = array<i32>} : memref<16x128xf32, #tpu.memory_space<vmem>>, vector<16x128xf32>,
    %cst_30 = arith.constant 0.000000e+00 : f32
    %49 = vector.broadcast %cst_30 : f32 to vector<16x128xf32>
    %50 = arith.maximumf %45, %49 : vector<16x128xf32>
    %c0_31 = arith.constant 0 : index
    %c0_32 = arith.constant 0 : index
    %51 = vector.load %arg6[%c0_31, %c0_32] : memref<16x128xf32, #tpu.memory_space<vmem>>, vector<16x128xf32>
    tpu.vector_store %arg6[%c0_31, %c0_32], %50 {strides = array<i32>} : memref<16x128xf32, #tpu.memory_space<vmem>>, vector<16x128xf32>,
    return
  }
  func.func @transform_0(%arg0: i32, %arg1: i32) -> (i32, i32) {
    %c0_i32 = arith.constant 0 : i32
    %c0_i32_0 = arith.constant 0 : i32
    return %arg0, %c0_i32 : i32, i32
  }
  func.func @transform_1(%arg0: i32, %arg1: i32) -> (i32, i32) {
    %c0_i32 = arith.constant 0 : i32
    %c0_i32_0 = arith.constant 0 : i32
    return %arg0, %c0_i32 : i32, i32
  }
  func.func @transform_2(%arg0: i32, %arg1: i32) -> (i32, i32, i32) {
    %c0_i32 = arith.constant 0 : i32
    %c0_i32_0 = arith.constant 0 : i32
    %c0_i32_1 = arith.constant 0 : i32
    return %c0_i32, %c0_i32_0, %arg1 : i32, i32, i32
  }
  func.func @transform_3(%arg0: i32, %arg1: i32) -> (i32, i32) {
    %c0_i32 = arith.constant 0 : i32
    return %arg0, %arg1 : i32, i32
  }
  func.func @transform_4(%arg0: i32, %arg1: i32) -> (i32, i32) {
    %c0_i32 = arith.constant 0 : i32
    return %arg0, %arg1 : i32, i32
  }
}

</mosaic_0001>

<llo_original>
// kernel: tpu_custom_call.1
$region0: #{tpu_custom_call.1}
  #allocation0 [shape = 'u32[]', space=smem, size = 0x4, offset = 0x4, fixed_abs, tag = 'smem constant byte address 0x4 - core index']
  #allocation1 [shape = 'u32[144,128]{1,0:T(1,128)}', space=vmem, size = 0x12000, scoped, tag = 'internal scratch']
  %s0 = inlined_call_operand.vmem [shape: f32[16,1], index: 0, kind: input, shape index: {}]
  %s1 = inlined_call_operand.vmem [shape: s32[16,1], index: 1, kind: input, shape index: {}]
  %s2 = inlined_call_operand.vmem [shape: f32[8,4,128], index: 2, kind: input, shape index: {}]
  %s3 = inlined_call_operand.hbm [shape: f32[16,128], index: 3, kind: output, shape index: {0}]
  %s4 = inlined_call_operand.hbm [shape: f32[16,128], index: 4, kind: output, shape index: {1}]
  %5 = xla_tuple %s3, %s4
  %s6 = sld [smem:[#allocation0]]
  $region30: #{tpu_custom_call.1} parent=0
    _
  %s8 = ssub.s32 1, %s6
  %s9 = scalar_select 0, %s8, %s6
  $region1: #{tpu_custom_call.1} parent=0
    #allocation2 [shape = 'u8[8192]{0}', space=vmem, size = 0x2000, scoped, tag = 'output window, operand 0, single buffered']
    #allocation3 [shape = 's32[1]{0}', space=sflag, size = 0x4, scoped, tag = 'scoped memory for tpu_custom_call.1']
    #allocation4 [shape = 'u8[8192]{0}', space=vmem, size = 0x2000, scoped, tag = 'output window, operand 1, single buffered']
    #allocation5 [shape = 's32[1]{0}', space=sflag, size = 0x4, scoped, tag = 'scoped memory for tpu_custom_call.1']
    %10 = vsyncpa [#allocation3], 0
    %11 = vsyncpa [#allocation5], 0
    // Predicated region
    $region2: #{tpu_custom_call.1} parent=1 // pred_check
      _
    $region3: #{tpu_custom_call.1} parent=1 // pred_check_branch
      %13 = sbr.rel (0) target = $region5
    $region4: #{tpu_custom_call.1} parent=1 // pred_region
      _
    $region5: #{tpu_custom_call.1} parent=1 // pred_fallthru
      _
    // Predicated region
    $region6: #{tpu_custom_call.1} parent=1 // pred_check
      _
    $region7: #{tpu_custom_call.1} parent=1 // pred_check_branch
      %15 = sbr.rel (0) target = $region9
    $region8: #{tpu_custom_call.1} parent=1 // pred_region
      _
    $region9: #{tpu_custom_call.1} parent=1 // pred_fallthru
      _
    // Predicated region
    $region10: #{tpu_custom_call.1} parent=1 // pred_check
      _
    $region11: #{tpu_custom_call.1} parent=1 // pred_check_branch
      %17 = sbr.rel (0) target = $region13
    $region12: #{tpu_custom_call.1} parent=1 // pred_region
      _
    $region13: #{tpu_custom_call.1} parent=1 // pred_fallthru
      _
    %v18 = vld [vmem:[%s0] sm:$0xff]
    %v19 = vld [vmem:[%s0 + $0x8] sm:$0xff]
    %v20 = vld [vmem:[%s1] sm:$0xff]
    %v21 = vld [vmem:[%s1 + $0x8] sm:$0xff]
    %v22 = vlaneseq
    %v23 = vand.u32 %v22, 127
    %24 = vset.pattern.permute.xlu0 0
    %25 = vperm.xlu0 %24, %v20
    %v26 = vpop.permute.xlu0 %25
    %27 = vset.pattern.permute.xlu0 0
    %28 = vperm.xlu0 %27, %v21
    %v29 = vpop.permute.xlu0 %28
    %vm30 = vcmp.eq.s32.totalorder %v23, %v26
    %vm31 = vcmp.eq.s32.totalorder %v23, %v29
    %v32 = vsel %vm30, 1, 0
    %v33 = vsel %vm31, 1, 0
    %v34 = vcvt.s32.f32 %v32
    %v35 = vcvt.s32.f32 %v33
    %37 = vset.pattern.permute.xlu0 0
    %38 = vperm.xlu0 %37, %v18
    %v39 = vpop.permute.xlu0 %38
    %42 = vset.pattern.permute.xlu0 0
    %43 = vperm.xlu0 %42, %v19
    %v44 = vpop.permute.xlu0 %43
    %v46 = vld [vmem:[%s2] sm:$0xf]
    %vm47 = vcmask 31744
    %v49 = vsel %vm47, %v34, 0
    %v52 = vsel %vm47, %v35, 0
    %vm54 = vcmask 1043456
    %v56 = vsel %vm54, %v46, 0
    %58 = vmatprep.subr.mxu0 0.0
    %59 = vmatpush1.msra.mxu0 %v56
    %60 = vmatprep.subr.mxu0 0.0
    %61 = vmatpush1.msra.mxu0 0.0
    %62 = vmatprep.subr.mxu0 0.0
    %63 = vmatpush1.msra.mxu0 0.0
    %64 = vmatprep.subr.mxu0 0.0
    %65 = vmatpush1.msra.mxu0 0.0
    %66 = vmatprep.subr.mxu0 0.0
    %67 = vmatpush1.msra.mxu0 0.0
    %68 = vmatprep.subr.mxu0 0.0
    %69 = vmatpush1.msra.mxu0 0.0
    %70 = vmatprep.subr.mxu0 0.0
    %71 = vmatpush1.msra.mxu0 0.0
    %72 = vmatprep.subr.mxu0 0.0
    %73 = vmatpush1.msra.mxu0 0.0
    %74 = vmatprep.subr.mxu0 0.0
    %75 = vmatpush1.msra.mxu0 0.0
    %76 = vmatprep.subr.mxu0 0.0
    %77 = vmatpush1.msra.mxu0 0.0
    %78 = vmatprep.subr.mxu0 0.0
    %79 = vmatpush1.msra.mxu0 0.0
    %80 = vmatprep.subr.mxu0 0.0
    %81 = vmatpush1.msra.mxu0 0.0
    %82 = vmatprep.subr.mxu0 0.0
    %83 = vmatpush1.msra.mxu0 0.0
    %84 = vmatprep.subr.mxu0 0.0
    %85 = vmatpush1.msra.mxu0 0.0
    %86 = vmatprep.subr.mxu0 0.0
    %87 = vmatpush1.msra.mxu0 0.0
    %88 = vmatprep.subr.mxu0 0.0
    %89 = vmatpush1.msra.mxu0 0.0
    %90 = vmatprep.subr.mxu0 0.0
    %91 = vmatpush1.msra.mxu0 0.0
    %92 = vmatprep.subr.mxu0 0.0
    %93 = vmatpush1.msra.mxu0 0.0
    %94 = vmatprep.subr.mxu0 0.0
    %95 = vmatpush1.msra.mxu0 0.0
    %96 = vmatprep.subr.mxu0 0.0
    %97 = vmatpush1.msra.mxu0 0.0
    %98 = vmatprep.subr.mxu0 0.0
    %99 = vmatpush1.msra.mxu0 0.0
    %100 = vmatprep.subr.mxu0 0.0
    %101 = vmatpush1.msra.mxu0 0.0
    %102 = vmatprep.subr.mxu0 0.0
    %103 = vmatpush1.msra.mxu0 0.0
    %104 = vmatprep.subr.mxu0 0.0
    %105 = vmatpush1.msra.mxu0 0.0
    %106 = vmatprep.subr.mxu0 0.0
    %107 = vmatpush1.msra.mxu0 0.0
    %108 = vmatprep.subr.mxu0 0.0
    %109 = vmatpush1.msra.mxu0 0.0
    %110 = vmatprep.subr.mxu0 0.0
    %111 = vmatpush1.msra.mxu0 0.0
    %112 = vmatprep.subr.mxu0 0.0
    %113 = vmatpush1.msra.mxu0 0.0
    %114 = vmatprep.subr.mxu0 0.0
    %115 = vmatpush1.msra.mxu0 0.0
    %116 = vmatprep.subr.mxu0 0.0
    %117 = vmatpush1.msra.mxu0 0.0
    %118 = vmatprep.subr.mxu0 0.0
    %119 = vmatpush1.msra.mxu0 0.0
    %120 = vmatprep.subr.mxu0 0.0
    %121 = vmatpush1.msra.mxu0 0.0
    %122 = vmatprep.mubr.f32.mxu0 0.0
    %123 = vmatmul.mubr.f32.gmra.mrb[0].mxu0 %v49
    %v124 = vpop.f32.mrb[0].mxu0
    %v125 = vadd.f32 0.0, %v124
    %v126 = vpop.f32.mrb[0].mxu0
    %127 = vmatprep.mubr.f32.mxu0 0.0
    %128 = vmatmul.mubr.f32.gmra.mrb[0].mxu0 %v52
    %v129 = vpop.f32.mrb[0].mxu0
    %v130 = vadd.f32 0.0, %v129
    %v131 = vpop.f32.mrb[0].mxu0
    %132 = vdwg.mxu0
    %v133 = vmul.f32 %v125, %v39
    %v134 = vmul.f32 %v130, %v44
    %v135 = vmul.f32 %v133, 1.442695
    %v136 = vpow.pop %v135
    %v137 = vmul.f32 %v134, 1.442695
    %v138 = vpow.pop %v137
    %s139 = scalar_lea.vmem %s2, 4
    %v140 = vld [vmem:[%s139] sm:$0xf]
    %v142 = vsel %vm54, %v140, 0
    %144 = vmatprep.subr.mxu0 0.0
    %145 = vmatpush1.msra.mxu0 %v142
    %146 = vmatprep.subr.mxu0 0.0
    %147 = vmatpush1.msra.mxu0 0.0
    %148 = vmatprep.subr.mxu0 0.0
    %149 = vmatpush1.msra.mxu0 0.0
    %150 = vmatprep.subr.mxu0 0.0
    %151 = vmatpush1.msra.mxu0 0.0
    %152 = vmatprep.subr.mxu0 0.0
    %153 = vmatpush1.msra.mxu0 0.0
    %154 = vmatprep.subr.mxu0 0.0
    %155 = vmatpush1.msra.mxu0 0.0
    %156 = vmatprep.subr.mxu0 0.0
    %157 = vmatpush1.msra.mxu0 0.0
    %158 = vmatprep.subr.mxu0 0.0
    %159 = vmatpush1.msra.mxu0 0.0
    %160 = vmatprep.subr.mxu0 0.0
    %161 = vmatpush1.msra.mxu0 0.0
    %162 = vmatprep.subr.mxu0 0.0
    %163 = vmatpush1.msra.mxu0 0.0
    %164 = vmatprep.subr.mxu0 0.0
    %165 = vmatpush1.msra.mxu0 0.0
    %166 = vmatprep.subr.mxu0 0.0
    %167 = vmatpush1.msra.mxu0 0.0
    %168 = vmatprep.subr.mxu0 0.0
    %169 = vmatpush1.msra.mxu0 0.0
    %170 = vmatprep.subr.mxu0 0.0
    %171 = vmatpush1.msra.mxu0 0.0
    %172 = vmatprep.subr.mxu0 0.0
    %173 = vmatpush1.msra.mxu0 0.0
    %174 = vmatprep.subr.mxu0 0.0
    %175 = vmatpush1.msra.mxu0 0.0
    %176 = vmatprep.subr.mxu0 0.0
    %177 = vmatpush1.msra.mxu0 0.0
    %178 = vmatprep.subr.mxu0 0.0
    %179 = vmatpush1.msra.mxu0 0.0
    %180 = vmatprep.subr.mxu0 0.0
    %181 = vmatpush1.msra.mxu0 0.0
    %182 = vmatprep.subr.mxu0 0.0
    %183 = vmatpush1.msra.mxu0 0.0
    %184 = vmatprep.subr.mxu0 0.0
    %185 = vmatpush1.msra.mxu0 0.0
    %186 = vmatprep.subr.mxu0 0.0
    %187 = vmatpush1.msra.mxu0 0.0
    %188 = vmatprep.subr.mxu0 0.0
    %189 = vmatpush1.msra.mxu0 0.0
    %190 = vmatprep.subr.mxu0 0.0
    %191 = vmatpush1.msra.mxu0 0.0
    %192 = vmatprep.subr.mxu0 0.0
    %193 = vmatpush1.msra.mxu0 0.0
    %194 = vmatprep.subr.mxu0 0.0
    %195 = vmatpush1.msra.mxu0 0.0
    %196 = vmatprep.subr.mxu0 0.0
    %197 = vmatpush1.msra.mxu0 0.0
    %198 = vmatprep.subr.mxu0 0.0
    %199 = vmatpush1.msra.mxu0 0.0
    %200 = vmatprep.subr.mxu0 0.0
    %201 = vmatpush1.msra.mxu0 0.0
    %202 = vmatprep.subr.mxu0 0.0
    %203 = vmatpush1.msra.mxu0 0.0
    %204 = vmatprep.subr.mxu0 0.0
    %205 = vmatpush1.msra.mxu0 0.0
    %206 = vmatprep.subr.mxu0 0.0
    %207 = vmatpush1.msra.mxu0 0.0
    %208 = vmatprep.mubr.f32.mxu0 0.0
    %209 = vmatmul.mubr.f32.gmra.mrb[0].mxu0 %v49
    %v210 = vpop.f32.mrb[0].mxu0
    %v211 = vadd.f32 0.0, %v210
    %v212 = vpop.f32.mrb[0].mxu0
    %213 = vmatprep.mubr.f32.mxu0 0.0
    %214 = vmatmul.mubr.f32.gmra.mrb[0].mxu0 %v52
    %v215 = vpop.f32.mrb[0].mxu0
    %v216 = vadd.f32 0.0, %v215
    %v217 = vpop.f32.mrb[0].mxu0
    %218 = vdwg.mxu0
    %v219 = vmul.f32 %v211, %v39
    %v220 = vmul.f32 %v216, %v44
    %v221 = vmul.f32 %v219, 1.442695
    %v222 = vpow.pop %v221
    %v223 = vmul.f32 %v220, 1.442695
    %v224 = vpow.pop %v223
    %s225 = scalar_lea.vmem %s2, 8
    %v226 = vld [vmem:[%s225] sm:$0xf]
    %s227 = scalar_lea.vmem %s2, 12
    %v228 = vld [vmem:[%s227] sm:$0xf]
    %v230 = vsel %vm54, %v228, 0
    %232 = vmatprep.subr.mxu0 0.0
    %233 = vmatpush1.msra.mxu0 %v230
    %234 = vmatprep.subr.mxu0 0.0
    %235 = vmatpush1.msra.mxu0 0.0
    %236 = vmatprep.subr.mxu0 0.0
    %237 = vmatpush1.msra.mxu0 0.0
    %238 = vmatprep.subr.mxu0 0.0
    %239 = vmatpush1.msra.mxu0 0.0
    %240 = vmatprep.subr.mxu0 0.0
    %241 = vmatpush1.msra.mxu0 0.0
    %242 = vmatprep.subr.mxu0 0.0
    %243 = vmatpush1.msra.mxu0 0.0
    %244 = vmatprep.subr.mxu0 0.0
    %245 = vmatpush1.msra.mxu0 0.0
    %246 = vmatprep.subr.mxu0 0.0
    %247 = vmatpush1.msra.mxu0 0.0
    %248 = vmatprep.subr.mxu0 0.0
    %249 = vmatpush1.msra.mxu0 0.0
    %250 = vmatprep.subr.mxu0 0.0
    %251 = vmatpush1.msra.mxu0 0.0
    %252 = vmatprep.subr.mxu0 0.0
    %253 = vmatpush1.msra.mxu0 0.0
    %254 = vmatprep.subr.mxu0 0.0
    %255 = vmatpush1.msra.mxu0 0.0
    %256 = vmatprep.subr.mxu0 0.0
    %257 = vmatpush1.msra.mxu0 0.0
    %258 = vmatprep.subr.mxu0 0.0
    %259 = vmatpush1.msra.mxu0 0.0
    %260 = vmatprep.subr.mxu0 0.0
    %261 = vmatpush1.msra.mxu0 0.0
    %262 = vmatprep.subr.mxu0 0.0
    %263 = vmatpush1.msra.mxu0 0.0
    %264 = vmatprep.subr.mxu0 0.0
    %265 = vmatpush1.msra.mxu0 0.0
    %266 = vmatprep.subr.mxu0 0.0
    %267 = vmatpush1.msra.mxu0 0.0
    %268 = vmatprep.subr.mxu0 0.0
    %269 = vmatpush1.msra.mxu0 0.0
    %270 = vmatprep.subr.mxu0 0.0
    %271 = vmatpush1.msra.mxu0 0.0
    %272 = vmatprep.subr.mxu0 0.0
    %273 = vmatpush1.msra.mxu0 0.0
    %274 = vmatprep.subr.mxu0 0.0
    %275 = vmatpush1.msra.mxu0 0.0
    %276 = vmatprep.subr.mxu0 0.0
    %277 = vmatpush1.msra.mxu0 0.0
    %278 = vmatprep.subr.mxu0 0.0
    %279 = vmatpush1.msra.mxu0 0.0
    %280 = vmatprep.subr.mxu0 0.0
    %281 = vmatpush1.msra.mxu0 0.0
    %282 = vmatprep.subr.mxu0 0.0
    %283 = vmatpush1.msra.mxu0 0.0
    %284 = vmatprep.subr.mxu0 0.0
    %285 = vmatpush1.msra.mxu0 0.0
    %286 = vmatprep.subr.mxu0 0.0
    %287 = vmatpush1.msra.mxu0 0.0
    %288 = vmatprep.subr.mxu0 0.0
    %289 = vmatpush1.msra.mxu0 0.0
    %290 = vmatprep.subr.mxu0 0.0
    %291 = vmatpush1.msra.mxu0 0.0
    %292 = vmatprep.subr.mxu0 0.0
    %293 = vmatpush1.msra.mxu0 0.0
    %294 = vmatprep.subr.mxu0 0.0
    %295 = vmatpush1.msra.mxu0 0.0
    %296 = vmatprep.mubr.f32.mxu0 0.0
    %297 = vmatmul.mubr.f32.gmra.mrb[0].mxu0 %v49
    %v298 = vpop.f32.mrb[0].mxu0
    %v299 = vadd.f32 0.0, %v298
    %v300 = vpop.f32.mrb[0].mxu0
    %301 = vmatprep.mubr.f32.mxu0 0.0
    %302 = vmatmul.mubr.f32.gmra.mrb[0].mxu0 %v52
    %v303 = vpop.f32.mrb[0].mxu0
    %v304 = vadd.f32 0.0, %v303
    %v305 = vpop.f32.mrb[0].mxu0
    %306 = vdwg.mxu0
    %v307 = vmul.f32 %v299, %v136
    %v308 = vmul.f32 %v304, %v138
    %v310 = vsel %vm54, %v226, 0
    %312 = vmatprep.subr.mxu0 0.0
    %313 = vmatpush1.msra.mxu0 %v310
    %314 = vmatprep.subr.mxu0 0.0
    %315 = vmatpush1.msra.mxu0 0.0
    %316 = vmatprep.subr.mxu0 0.0
    %317 = vmatpush1.msra.mxu0 0.0
    %318 = vmatprep.subr.mxu0 0.0
    %319 = vmatpush1.msra.mxu0 0.0
    %320 = vmatprep.subr.mxu0 0.0
    %321 = vmatpush1.msra.mxu0 0.0
    %322 = vmatprep.subr.mxu0 0.0
    %323 = vmatpush1.msra.mxu0 0.0
    %324 = vmatprep.subr.mxu0 0.0
    %325 = vmatpush1.msra.mxu0 0.0
    %326 = vmatprep.subr.mxu0 0.0
    %327 = vmatpush1.msra.mxu0 0.0
    %328 = vmatprep.subr.mxu0 0.0
    %329 = vmatpush1.msra.mxu0 0.0
    %330 = vmatprep.subr.mxu0 0.0
    %331 = vmatpush1.msra.mxu0 0.0
    %332 = vmatprep.subr.mxu0 0.0
    %333 = vmatpush1.msra.mxu0 0.0
    %334 = vmatprep.subr.mxu0 0.0
    %335 = vmatpush1.msra.mxu0 0.0
    %336 = vmatprep.subr.mxu0 0.0
    %337 = vmatpush1.msra.mxu0 0.0
    %338 = vmatprep.subr.mxu0 0.0
    %339 = vmatpush1.msra.mxu0 0.0
    %340 = vmatprep.subr.mxu0 0.0
    %341 = vmatpush1.msra.mxu0 0.0
    %342 = vmatprep.subr.mxu0 0.0
    %343 = vmatpush1.msra.mxu0 0.0
    %344 = vmatprep.subr.mxu0 0.0
    %345 = vmatpush1.msra.mxu0 0.0
    %346 = vmatprep.subr.mxu0 0.0
    %347 = vmatpush1.msra.mxu0 0.0
    %348 = vmatprep.subr.mxu0 0.0
    %349 = vmatpush1.msra.mxu0 0.0
    %350 = vmatprep.subr.mxu0 0.0
    %351 = vmatpush1.msra.mxu0 0.0
    %352 = vmatprep.subr.mxu0 0.0
    %353 = vmatpush1.msra.mxu0 0.0
    %354 = vmatprep.subr.mxu0 0.0
    %355 = vmatpush1.msra.mxu0 0.0
    %356 = vmatprep.subr.mxu0 0.0
    %357 = vmatpush1.msra.mxu0 0.0
    %358 = vmatprep.subr.mxu0 0.0
    %359 = vmatpush1.msra.mxu0 0.0
    %360 = vmatprep.subr.mxu0 0.0
    %361 = vmatpush1.msra.mxu0 0.0
    %362 = vmatprep.subr.mxu0 0.0
    %363 = vmatpush1.msra.mxu0 0.0
    %364 = vmatprep.subr.mxu0 0.0
    %365 = vmatpush1.msra.mxu0 0.0
    %366 = vmatprep.subr.mxu0 0.0
    %367 = vmatpush1.msra.mxu0 0.0
    %368 = vmatprep.subr.mxu0 0.0
    %369 = vmatpush1.msra.mxu0 0.0
    %370 = vmatprep.subr.mxu0 0.0
    %371 = vmatpush1.msra.mxu0 0.0
    %372 = vmatprep.subr.mxu0 0.0
    %373 = vmatpush1.msra.mxu0 0.0
    %374 = vmatprep.subr.mxu0 0.0
    %375 = vmatpush1.msra.mxu0 0.0
    %376 = vmatprep.mubr.f32.mxu0 0.0
    %377 = vmatmul.mubr.f32.gmra.mrb[0].mxu0 %v49
    %v378 = vpop.f32.mrb[0].mxu0
    %v379 = vadd.f32 %v307, %v378
    %v380 = vpop.f32.mrb[0].mxu0
    %381 = vmatprep.mubr.f32.mxu0 0.0
    %382 = vmatmul.mubr.f32.gmra.mrb[0].mxu0 %v52
    %v383 = vpop.f32.mrb[0].mxu0
    %v384 = vadd.f32 %v308, %v383
    %v385 = vpop.f32.mrb[0].mxu0
    %386 = vdwg.mxu0
    %s387 = scalar_lea.vmem %s2, 16
    %v388 = vld [vmem:[%s387] sm:$0xf]
    %s389 = scalar_lea.vmem %s2, 20
    %v390 = vld [vmem:[%s389] sm:$0xf]
    %v392 = vsel %vm54, %v390, 0
    %394 = vmatprep.subr.mxu0 0.0
    %395 = vmatpush1.msra.mxu0 %v392
    %396 = vmatprep.subr.mxu0 0.0
    %397 = vmatpush1.msra.mxu0 0.0
    %398 = vmatprep.subr.mxu0 0.0
    %399 = vmatpush1.msra.mxu0 0.0
    %400 = vmatprep.subr.mxu0 0.0
    %401 = vmatpush1.msra.mxu0 0.0
    %402 = vmatprep.subr.mxu0 0.0
    %403 = vmatpush1.msra.mxu0 0.0
    %404 = vmatprep.subr.mxu0 0.0
    %405 = vmatpush1.msra.mxu0 0.0
    %406 = vmatprep.subr.mxu0 0.0
    %407 = vmatpush1.msra.mxu0 0.0
    %408 = vmatprep.subr.mxu0 0.0
    %409 = vmatpush1.msra.mxu0 0.0
    %410 = vmatprep.subr.mxu0 0.0
    %411 = vmatpush1.msra.mxu0 0.0
    %412 = vmatprep.subr.mxu0 0.0
    %413 = vmatpush1.msra.mxu0 0.0
    %414 = vmatprep.subr.mxu0 0.0
    %415 = vmatpush1.msra.mxu0 0.0
    %416 = vmatprep.subr.mxu0 0.0
    %417 = vmatpush1.msra.mxu0 0.0
    %418 = vmatprep.subr.mxu0 0.0
    %419 = vmatpush1.msra.mxu0 0.0
    %420 = vmatprep.subr.mxu0 0.0
    %421 = vmatpush1.msra.mxu0 0.0
    %422 = vmatprep.subr.mxu0 0.0
    %423 = vmatpush1.msra.mxu0 0.0
    %424 = vmatprep.subr.mxu0 0.0
    %425 = vmatpush1.msra.mxu0 0.0
    %426 = vmatprep.subr.mxu0 0.0
    %427 = vmatpush1.msra.mxu0 0.0
    %428 = vmatprep.subr.mxu0 0.0
    %429 = vmatpush1.msra.mxu0 0.0
    %430 = vmatprep.subr.mxu0 0.0
    %431 = vmatpush1.msra.mxu0 0.0
    %432 = vmatprep.subr.mxu0 0.0
    %433 = vmatpush1.msra.mxu0 0.0
    %434 = vmatprep.subr.mxu0 0.0
    %435 = vmatpush1.msra.mxu0 0.0
    %436 = vmatprep.subr.mxu0 0.0
    %437 = vmatpush1.msra.mxu0 0.0
    %438 = vmatprep.subr.mxu0 0.0
    %439 = vmatpush1.msra.mxu0 0.0
    %440 = vmatprep.subr.mxu0 0.0
    %441 = vmatpush1.msra.mxu0 0.0
    %442 = vmatprep.subr.mxu0 0.0
    %443 = vmatpush1.msra.mxu0 0.0
    %444 = vmatprep.subr.mxu0 0.0
    %445 = vmatpush1.msra.mxu0 0.0
    %446 = vmatprep.subr.mxu0 0.0
    %447 = vmatpush1.msra.mxu0 0.0
    %448 = vmatprep.subr.mxu0 0.0
    %449 = vmatpush1.msra.mxu0 0.0
    %450 = vmatprep.subr.mxu0 0.0
    %451 = vmatpush1.msra.mxu0 0.0
    %452 = vmatprep.subr.mxu0 0.0
    %453 = vmatpush1.msra.mxu0 0.0
    %454 = vmatprep.subr.mxu0 0.0
    %455 = vmatpush1.msra.mxu0 0.0
    %456 = vmatprep.subr.mxu0 0.0
    %457 = vmatpush1.msra.mxu0 0.0
    %458 = vmatprep.mubr.f32.mxu0 0.0
    %459 = vmatmul.mubr.f32.gmra.mrb[0].mxu0 %v49
    %v460 = vpop.f32.mrb[0].mxu0
    %v461 = vadd.f32 0.0, %v460
    %v462 = vpop.f32.mrb[0].mxu0
    %463 = vmatprep.mubr.f32.mxu0 0.0
    %464 = vmatmul.mubr.f32.gmra.mrb[0].mxu0 %v52
    %v465 = vpop.f32.mrb[0].mxu0
    %v466 = vadd.f32 0.0, %v465
    %v467 = vpop.f32.mrb[0].mxu0
    %468 = vdwg.mxu0
    %v469 = vmul.f32 %v461, %v222
    %v470 = vmul.f32 %v466, %v224
    %v472 = vsel %vm54, %v388, 0
    %474 = vmatprep.subr.mxu0 0.0
    %475 = vmatpush1.msra.mxu0 %v472
    %476 = vmatprep.subr.mxu0 0.0
    %477 = vmatpush1.msra.mxu0 0.0
    %478 = vmatprep.subr.mxu0 0.0
    %479 = vmatpush1.msra.mxu0 0.0
    %480 = vmatprep.subr.mxu0 0.0
    %481 = vmatpush1.msra.mxu0 0.0
    %482 = vmatprep.subr.mxu0 0.0
    %483 = vmatpush1.msra.mxu0 0.0
    %484 = vmatprep.subr.mxu0 0.0
    %485 = vmatpush1.msra.mxu0 0.0
    %486 = vmatprep.subr.mxu0 0.0
    %487 = vmatpush1.msra.mxu0 0.0
    %488 = vmatprep.subr.mxu0 0.0
    %489 = vmatpush1.msra.mxu0 0.0
    %490 = vmatprep.subr.mxu0 0.0
    %491 = vmatpush1.msra.mxu0 0.0
    %492 = vmatprep.subr.mxu0 0.0
    %493 = vmatpush1.msra.mxu0 0.0
    %494 = vmatprep.subr.mxu0 0.0
    %495 = vmatpush1.msra.mxu0 0.0
    %496 = vmatprep.subr.mxu0 0.0
    %497 = vmatpush1.msra.mxu0 0.0
    %498 = vmatprep.subr.mxu0 0.0
    %499 = vmatpush1.msra.mxu0 0.0
    %500 = vmatprep.subr.mxu0 0.0
    %501 = vmatpush1.msra.mxu0 0.0
    %502 = vmatprep.subr.mxu0 0.0
    %503 = vmatpush1.msra.mxu0 0.0
    %504 = vmatprep.subr.mxu0 0.0
    %505 = vmatpush1.msra.mxu0 0.0
    %506 = vmatprep.subr.mxu0 0.0
    %507 = vmatpush1.msra.mxu0 0.0
    %508 = vmatprep.subr.mxu0 0.0
    %509 = vmatpush1.msra.mxu0 0.0
    %510 = vmatprep.subr.mxu0 0.0
    %511 = vmatpush1.msra.mxu0 0.0
    %512 = vmatprep.subr.mxu0 0.0
    %513 = vmatpush1.msra.mxu0 0.0
    %514 = vmatprep.subr.mxu0 0.0
    %515 = vmatpush1.msra.mxu0 0.0
    %516 = vmatprep.subr.mxu0 0.0
    %517 = vmatpush1.msra.mxu0 0.0
    %518 = vmatprep.subr.mxu0 0.0
    %519 = vmatpush1.msra.mxu0 0.0
    %520 = vmatprep.subr.mxu0 0.0
    %521 = vmatpush1.msra.mxu0 0.0
    %522 = vmatprep.subr.mxu0 0.0
    %523 = vmatpush1.msra.mxu0 0.0
    %524 = vmatprep.subr.mxu0 0.0
    %525 = vmatpush1.msra.mxu0 0.0
    %526 = vmatprep.subr.mxu0 0.0
    %527 = vmatpush1.msra.mxu0 0.0
    %528 = vmatprep.subr.mxu0 0.0
    %529 = vmatpush1.msra.mxu0 0.0
    %530 = vmatprep.subr.mxu0 0.0
    %531 = vmatpush1.msra.mxu0 0.0
    %532 = vmatprep.subr.mxu0 0.0
    %533 = vmatpush1.msra.mxu0 0.0
    %534 = vmatprep.subr.mxu0 0.0
    %535 = vmatpush1.msra.mxu0 0.0
    %536 = vmatprep.subr.mxu0 0.0
    %537 = vmatpush1.msra.mxu0 0.0
    %538 = vmatprep.mubr.f32.mxu0 0.0
    %539 = vmatmul.mubr.f32.gmra.mrb[0].mxu0 %v49
    %v540 = vpop.f32.mrb[0].mxu0
    %v541 = vadd.f32 %v469, %v540
    %v542 = vpop.f32.mrb[0].mxu0
    %543 = vmatprep.mubr.f32.mxu0 0.0
    %544 = vmatmul.mubr.f32.gmra.mrb[0].mxu0 %v52
    %v545 = vpop.f32.mrb[0].mxu0
    %v546 = vadd.f32 %v470, %v545
    %v547 = vpop.f32.mrb[0].mxu0
    %548 = vdwg.mxu0
    %s549 = scalar_lea.vmem %s2, 24
    %v550 = vld [vmem:[%s549] sm:$0xf]
    %v552 = vsel %vm54, %v550, 0
    %554 = vmatprep.subr.mxu0 0.0
    %555 = vmatpush1.msra.mxu0 %v552
    %556 = vmatprep.subr.mxu0 0.0
    %557 = vmatpush1.msra.mxu0 0.0
    %558 = vmatprep.subr.mxu0 0.0
    %559 = vmatpush1.msra.mxu0 0.0
    %560 = vmatprep.subr.mxu0 0.0
    %561 = vmatpush1.msra.mxu0 0.0
    %562 = vmatprep.subr.mxu0 0.0
    %563 = vmatpush1.msra.mxu0 0.0
    %564 = vmatprep.subr.mxu0 0.0
    %565 = vmatpush1.msra.mxu0 0.0
    %566 = vmatprep.subr.mxu0 0.0
    %567 = vmatpush1.msra.mxu0 0.0
    %568 = vmatprep.subr.mxu0 0.0
    %569 = vmatpush1.msra.mxu0 0.0
    %570 = vmatprep.subr.mxu0 0.0
    %571 = vmatpush1.msra.mxu0 0.0
    %572 = vmatprep.subr.mxu0 0.0
    %573 = vmatpush1.msra.mxu0 0.0
    %574 = vmatprep.subr.mxu0 0.0
    %575 = vmatpush1.msra.mxu0 0.0
    %576 = vmatprep.subr.mxu0 0.0
    %577 = vmatpush1.msra.mxu0 0.0
    %578 = vmatprep.subr.mxu0 0.0
    %579 = vmatpush1.msra.mxu0 0.0
    %580 = vmatprep.subr.mxu0 0.0
    %581 = vmatpush1.msra.mxu0 0.0
    %582 = vmatprep.subr.mxu0 0.0
    %583 = vmatpush1.msra.mxu0 0.0
    %584 = vmatprep.subr.mxu0 0.0
    %585 = vmatpush1.msra.mxu0 0.0
    %586 = vmatprep.subr.mxu0 0.0
    %587 = vmatpush1.msra.mxu0 0.0
    %588 = vmatprep.subr.mxu0 0.0
    %589 = vmatpush1.msra.mxu0 0.0
    %590 = vmatprep.subr.mxu0 0.0
    %591 = vmatpush1.msra.mxu0 0.0
    %592 = vmatprep.subr.mxu0 0.0
    %593 = vmatpush1.msra.mxu0 0.0
    %594 = vmatprep.subr.mxu0 0.0
    %595 = vmatpush1.msra.mxu0 0.0
    %596 = vmatprep.subr.mxu0 0.0
    %597 = vmatpush1.msra.mxu0 0.0
    %598 = vmatprep.subr.mxu0 0.0
    %599 = vmatpush1.msra.mxu0 0.0
    %600 = vmatprep.subr.mxu0 0.0
    %601 = vmatpush1.msra.mxu0 0.0
    %602 = vmatprep.subr.mxu0 0.0
    %603 = vmatpush1.msra.mxu0 0.0
    %604 = vmatprep.subr.mxu0 0.0
    %605 = vmatpush1.msra.mxu0 0.0
    %606 = vmatprep.subr.mxu0 0.0
    %607 = vmatpush1.msra.mxu0 0.0
    %608 = vmatprep.subr.mxu0 0.0
    %609 = vmatpush1.msra.mxu0 0.0
    %610 = vmatprep.subr.mxu0 0.0
    %611 = vmatpush1.msra.mxu0 0.0
    %612 = vmatprep.subr.mxu0 0.0
    %613 = vmatpush1.msra.mxu0 0.0
    %614 = vmatprep.subr.mxu0 0.0
    %615 = vmatpush1.msra.mxu0 0.0
    %616 = vmatprep.subr.mxu0 0.0
    %617 = vmatpush1.msra.mxu0 0.0
    %618 = vmatprep.mubr.f32.mxu0 0.0
    %619 = vmatmul.mubr.f32.gmra.mrb[0].mxu0 %v49
    %v620 = vpop.f32.mrb[0].mxu0
    %v621 = vadd.f32 0.0, %v620
    %v622 = vpop.f32.mrb[0].mxu0
    %623 = vmatprep.mubr.f32.mxu0 0.0
    %624 = vmatmul.mubr.f32.gmra.mrb[0].mxu0 %v52
    %v625 = vpop.f32.mrb[0].mxu0
    %v626 = vadd.f32 0.0, %v625
    %v627 = vpop.f32.mrb[0].mxu0
    %628 = vdwg.mxu0
    %v629 = vmul.f32 %v621, %v136
    %v630 = vmul.f32 %v626, %v138
    %v631 = vadd.f32 %v541, %v629
    %v632 = vadd.f32 %v546, %v630
    %s633 = scalar_lea.vmem %s2, 28
    %v634 = vld [vmem:[%s633] sm:$0xf]
    %v636 = vsel %vm54, %v634, 0
    %638 = vmatprep.subr.mxu0 0.0
    %639 = vmatpush1.msra.mxu0 %v636
    %640 = vmatprep.subr.mxu0 0.0
    %641 = vmatpush1.msra.mxu0 0.0
    %642 = vmatprep.subr.mxu0 0.0
    %643 = vmatpush1.msra.mxu0 0.0
    %644 = vmatprep.subr.mxu0 0.0
    %645 = vmatpush1.msra.mxu0 0.0
    %646 = vmatprep.subr.mxu0 0.0
    %647 = vmatpush1.msra.mxu0 0.0
    %648 = vmatprep.subr.mxu0 0.0
    %649 = vmatpush1.msra.mxu0 0.0
    %650 = vmatprep.subr.mxu0 0.0
    %651 = vmatpush1.msra.mxu0 0.0
    %652 = vmatprep.subr.mxu0 0.0
    %653 = vmatpush1.msra.mxu0 0.0
    %654 = vmatprep.subr.mxu0 0.0
    %655 = vmatpush1.msra.mxu0 0.0
    %656 = vmatprep.subr.mxu0 0.0
    %657 = vmatpush1.msra.mxu0 0.0
    %658 = vmatprep.subr.mxu0 0.0
    %659 = vmatpush1.msra.mxu0 0.0
    %660 = vmatprep.subr.mxu0 0.0
    %661 = vmatpush1.msra.mxu0 0.0
    %662 = vmatprep.subr.mxu0 0.0
    %663 = vmatpush1.msra.mxu0 0.0
    %664 = vmatprep.subr.mxu0 0.0
    %665 = vmatpush1.msra.mxu0 0.0
    %666 = vmatprep.subr.mxu0 0.0
    %667 = vmatpush1.msra.mxu0 0.0
    %668 = vmatprep.subr.mxu0 0.0
    %669 = vmatpush1.msra.mxu0 0.0
    %670 = vmatprep.subr.mxu0 0.0
    %671 = vmatpush1.msra.mxu0 0.0
    %672 = vmatprep.subr.mxu0 0.0
    %673 = vmatpush1.msra.mxu0 0.0
    %674 = vmatprep.subr.mxu0 0.0
    %675 = vmatpush1.msra.mxu0 0.0
    %676 = vmatprep.subr.mxu0 0.0
    %677 = vmatpush1.msra.mxu0 0.0
    %678 = vmatprep.subr.mxu0 0.0
    %679 = vmatpush1.msra.mxu0 0.0
    %680 = vmatprep.subr.mxu0 0.0
    %681 = vmatpush1.msra.mxu0 0.0
    %682 = vmatprep.subr.mxu0 0.0
    %683 = vmatpush1.msra.mxu0 0.0
    %684 = vmatprep.subr.mxu0 0.0
    %685 = vmatpush1.msra.mxu0 0.0
    %686 = vmatprep.subr.mxu0 0.0
    %687 = vmatpush1.msra.mxu0 0.0
    %688 = vmatprep.subr.mxu0 0.0
    %689 = vmatpush1.msra.mxu0 0.0
    %690 = vmatprep.subr.mxu0 0.0
    %691 = vmatpush1.msra.mxu0 0.0
    %692 = vmatprep.subr.mxu0 0.0
    %693 = vmatpush1.msra.mxu0 0.0
    %694 = vmatprep.subr.mxu0 0.0
    %695 = vmatpush1.msra.mxu0 0.0
    %696 = vmatprep.subr.mxu0 0.0
    %697 = vmatpush1.msra.mxu0 0.0
    %698 = vmatprep.subr.mxu0 0.0
    %699 = vmatpush1.msra.mxu0 0.0
    %700 = vmatprep.subr.mxu0 0.0
    %701 = vmatpush1.msra.mxu0 0.0
    %702 = vmatprep.mubr.f32.mxu0 0.0
    %703 = vmatmul.mubr.f32.gmra.mrb[0].mxu0 %v49
    %v704 = vpop.f32.mrb[0].mxu0
    %v705 = vadd.f32 0.0, %v704
    %v706 = vpop.f32.mrb[0].mxu0
    %707 = vmatprep.mubr.f32.mxu0 0.0
    %708 = vmatmul.mubr.f32.gmra.mrb[0].mxu0 %v52
    %v709 = vpop.f32.mrb[0].mxu0
    %v710 = vadd.f32 0.0, %v709
    %v711 = vpop.f32.mrb[0].mxu0
    %712 = vdwg.mxu0
    %v713 = vmul.f32 %v39, %v222
    %v714 = vmul.f32 %v44, %v224
    %v715 = vmul.f32 %v705, %v713
    %v716 = vmul.f32 %v710, %v714
    %v717 = vadd.f32 %v631, %v715
    %v718 = vadd.f32 %v632, %v716
    %v719 = vmax.f32 %v379, 0.0
    %v720 = vmax.f32 %v384, 0.0
    %721 = vst [vmem:[#allocation2] sm:$0xff] %v719
    %722 = vst [vmem:[#allocation2 + $0x8] sm:$0xff] %v720
    %v723 = vmax.f32 %v717, 0.0
    %v724 = vmax.f32 %v718, 0.0
    %725 = vst [vmem:[#allocation4] sm:$0xff] %v723
    %726 = vst [vmem:[#allocation4 + $0x8] sm:$0xff] %v724
    // Predicated region
    $region14: #{tpu_custom_call.1} parent=1 // pred_check
      _
    $region15: #{tpu_custom_call.1} parent=1 // pred_check_branch
      %728 = sbr.rel (0) target = $region17
    $region16: #{tpu_custom_call.1} parent=1 // pred_region
      %s730 = ssub.s32 256, 256
      %731 = vsyncadd [#allocation3], %s730
      %s732 = sshll.u32 [#allocation2], 4
      %s733 = int_to_ptr.vmem [resolvable:$true] %s732
      %738 = dma.vmem_to_hbm [thread:$0]  %s733, 256, %s3, [#allocation3], 128, 128, 8
    $region17: #{tpu_custom_call.1} parent=1 // pred_fallthru
      _
    // Predicated region
    $region18: #{tpu_custom_call.1} parent=1 // pred_check
      _
    $region19: #{tpu_custom_call.1} parent=1 // pred_check_branch
      %740 = sbr.rel (0) target = $region21
    $region20: #{tpu_custom_call.1} parent=1 // pred_region
      %s742 = ssub.s32 256, 256
      %743 = vsyncadd [#allocation5], %s742
      %s744 = sshll.u32 [#allocation4], 4
      %s745 = int_to_ptr.vmem [resolvable:$true] %s744
      %750 = dma.vmem_to_hbm [thread:$0]  %s745, 256, %s4, [#allocation5], 128, 128, 8
    $region21: #{tpu_custom_call.1} parent=1 // pred_fallthru
      _
    // Predicated region
    $region22: #{tpu_custom_call.1} parent=1 // pred_check
      _
    $region23: #{tpu_custom_call.1} parent=1 // pred_check_branch
      %752 = sbr.rel (0) target = $region25
    $region24: #{tpu_custom_call.1} parent=1 // pred_region
      %753 = dma.done [#allocation3], 256
    $region25: #{tpu_custom_call.1} parent=1 // pred_fallthru
      _
    // Predicated region
    $region26: #{tpu_custom_call.1} parent=1 // pred_check
      _
    $region27: #{tpu_custom_call.1} parent=1 // pred_check_branch
      %755 = sbr.rel (0) target = $region29
    $region28: #{tpu_custom_call.1} parent=1 // pred_region
      %756 = dma.done [#allocation5], 256
    $region29: #{tpu_custom_call.1} parent=1 // pred_fallthru
      _
    %757 = vsyncpa [#allocation3], 1
    %758 = vsyncpa [#allocation5], 1

</llo_original>
